<compile_context>
chip_gen: v6e
topology: v6e:2x2x1
jax: 0.10.0
libtpu: 0.0.40
codegen_flags: <defaults>
</compile_context>

<pallas_src>
import functools

import jax
import jax.numpy as jnp
from jax.experimental import pallas as pl
from jax.experimental.pallas import tpu as pltpu


def _critic_kernel(x_ref, params_ref, o_ref, *, num_inputs):
    x = x_ref[...]                                   # (B, num_inputs)
    p = params_ref[...]                              # (num_inputs + 3, hidden)

    # Static slices of the packed parameter block (zero runtime cost).
    w1 = p[:num_inputs, :]                           # (num_inputs, hidden)
    b1 = p[num_inputs:num_inputs + 1, :]             # (1, hidden)
    w2_row = p[num_inputs + 1:num_inputs + 2, :]     # (1, hidden) == w2^T
    b2 = p[num_inputs + 2:num_inputs + 3, 0:1]       # (1, 1) scalar tile

    # --- linear1 + ReLU: one MXU matmul, VPU epilogue -----------------------
    h = jnp.dot(x, w1, preferred_element_type=jnp.float32) + b1
    h = jnp.maximum(h, 0.0)                          # (B, hidden)

    # --- linear2 as multiply + lane reduction (no second MXU pass) ----------
    out = jnp.sum(h * w2_row, axis=-1, keepdims=True) + b2   # (B, 1)
    o_ref[...] = out.astype(o_ref.dtype)


def critic_forward(state, params):
    """state: (B, num_inputs) f32; params: packed (num_inputs+3, hidden) f32.

    Returns (B, 1) f32 critic values.
    """
    batch, num_inputs = state.shape
    kernel = functools.partial(_critic_kernel, num_inputs=num_inputs)
    vmem = lambda: pl.BlockSpec(memory_space=pltpu.VMEM)
    return pl.pallas_call(
        kernel,
        out_shape=jax.ShapeDtypeStruct((batch, 1), jnp.float32),
        in_specs=[vmem(), vmem()],
        out_specs=vmem(),
    )(state, params)


def init_params(key, num_inputs, hidden_size):
    """Deterministic init mimicking torch.nn.Linear (uniform +/- 1/sqrt(fan_in)).

    Returns the single packed kernel operand (one param DMA per call) and the
    raw (w1, b1, w2, b2) for the pure-JAX reference check.
    """
    k1, k2, k3, k4 = jax.random.split(key, 4)
    bound1 = 1.0 / jnp.sqrt(num_inputs)
    bound2 = 1.0 / jnp.sqrt(hidden_size)
    # stored as (in_features, out_features) == torch weight transposed
    w1 = jax.random.uniform(k1, (num_inputs, hidden_size), jnp.float32,
                            -bound1, bound1)
    b1 = jax.random.uniform(k2, (1, hidden_size), jnp.float32, -bound1, bound1)
    w2 = jax.random.uniform(k3, (hidden_size, 1), jnp.float32, -bound2, bound2)
    b2 = jax.random.uniform(k4, (1, 1), jnp.float32, -bound2, bound2)

    # One-time host-side packing into a single (num_inputs + 3, hidden) block:
    #   rows [0, num_inputs)      -> w1
    #   row  num_inputs           -> b1
    #   row  num_inputs + 1       -> w2^T
    #   row  num_inputs + 2       -> b2 broadcast across lanes
    b2_row = jnp.full((1, hidden_size), b2[0, 0], dtype=jnp.float32)
    params = jnp.concatenate([w1, b1, w2.T, b2_row], axis=0)
    return params, (w1, b1, w2, b2)


if __name__ == "__main__":
    num_inputs = 4
    hidden_size = 32

    key = jax.random.PRNGKey(0)
    pkey, skey = jax.random.split(key)
    params, (w1, b1, w2, b2) = init_params(pkey, num_inputs, hidden_size)

    # single env step: state vector -> unsqueeze(0), as the torch forward does
    state = jax.random.normal(skey, (num_inputs,), jnp.float32)
    state2d = state[None, :]  # (1, num_inputs)

    value = critic_forward(state2d, params)
    value = jax.block_until_ready(value)

    ref = jnp.maximum(state2d @ w1 + b1, 0.0) @ w2 + b2
    assert value.shape == (1, 1)
    assert jnp.allclose(value, ref, atol=1e-5, rtol=1e-5)

    # batched variant: amortizes per-pallas_call launch overhead across steps
    batch = 8
    states = jax.random.normal(jax.random.PRNGKey(1), (batch, num_inputs),
                               jnp.float32)
    values_b = jax.block_until_ready(critic_forward(states, params))
    ref_b = jnp.maximum(states @ w1 + b1, 0.0) @ w2 + b2
    assert values_b.shape == (batch, 1)
    assert jnp.allclose(values_b, ref_b, atol=1e-5, rtol=1e-5)

    # TODO(synk): optimizer (Adam) / training step not translated -- forward only.
    print("KERNEL_OK")
</pallas_src>

<mosaic_0001>
module attributes {stable_mosaic.version = 11 : i64} {
  func.func @_critic_kernel(%arg0: memref<1x4xf32, #tpu.memory_space<vmem>>, %arg1: memref<7x32xf32, #tpu.memory_space<vmem>>, %arg2: memref<1x1xf32, #tpu.memory_space<vmem>>) attributes {dimension_semantics = [], scalar_prefetch = 0 : i64, scratch_operands = 0 : i64, tpu.core_type = #tpu.core_type<tc>} {
    %c0 = arith.constant 0 : index
    %c0_0 = arith.constant 0 : index
    %0 = vector.load %arg0[%c0, %c0_0] : memref<1x4xf32, #tpu.memory_space<vmem>>, vector<1x4xf32>
    %c0_1 = arith.constant 0 : index
    %c0_2 = arith.constant 0 : index
    %1 = vector.load %arg1[%c0_1, %c0_2] : memref<7x32xf32, #tpu.memory_space<vmem>>, vector<7x32xf32>
    %2 = vector.extract_strided_slice %1 {offsets = [0, 0], sizes = [4, 32], strides = [1, 1]} : vector<7x32xf32> to vector<4x32xf32>
    %3 = vector.extract_strided_slice %1 {offsets = [4, 0], sizes = [1, 32], strides = [1, 1]} : vector<7x32xf32> to vector<1x32xf32>
    %4 = vector.extract_strided_slice %1 {offsets = [5, 0], sizes = [1, 32], strides = [1, 1]} : vector<7x32xf32> to vector<1x32xf32>
    %5 = vector.extract_strided_slice %1 {offsets = [6, 0], sizes = [1, 1], strides = [1, 1]} : vector<7x32xf32> to vector<1x1xf32>
    %cst = arith.constant dense<0.000000e+00> : vector<1x32xf32>
    %6 = tpu.matmul %0, %2, %cst {dimension_numbers = #tpu.dot_dimension_numbers<[1], [0], [0], [1], [0, 0, 1, 1], [], []>} : vector<1x4xf32>, vector<4x32xf32>, vector<1x32xf32> -> vector<1x32xf32>
    %7 = arith.addf %6, %3 : vector<1x32xf32>
    %cst_3 = arith.constant 0.000000e+00 : f32
    %8 = vector.broadcast %cst_3 : f32 to vector<1x32xf32>
    %9 = arith.maximumf %7, %8 : vector<1x32xf32>
    %10 = arith.mulf %9, %4 : vector<1x32xf32>
    %cst_4 = arith.constant dense<0.000000e+00> : vector<1xf32>
    %11 = vector.multi_reduction <add>, %10, %cst_4 [1] : vector<1x32xf32> to vector<1xf32>
    %12 = vector.shape_cast %11 : vector<1xf32> to vector<1x1xf32>
    %13 = arith.addf %12, %5 : vector<1x1xf32>
    %c0_5 = arith.constant 0 : index
    %c0_6 = arith.constant 0 : index
    %14 = vector.load %arg2[%c0_5, %c0_6] : memref<1x1xf32, #tpu.memory_space<vmem>>, vector<1x1xf32>
    tpu.vector_store %arg2[%c0_5, %c0_6], %13 {strides = array<i32>} : memref<1x1xf32, #tpu.memory_space<vmem>>, vector<1x1xf32>,
    return
  }
}

</mosaic_0001>

<llo_original>
// kernel: tpu_custom_call.1
$region0: #{tpu_custom_call.1}
  #allocation0 [shape = 'u32[]', space=smem, size = 0x4, offset = 0x4, fixed_abs, tag = 'smem constant byte address 0x4 - core index']
  #allocation1 [shape = 'u32[144,128]{1,0:T(1,128)}', space=vmem, size = 0x12000, scoped, tag = 'internal scratch']
  %s0 = inlined_call_operand.hbm [shape: f32[1,4], index: 0, kind: input, shape index: {}]
  %s1 = inlined_call_operand.hbm [shape: f32[7,32], index: 1, kind: input, shape index: {}]
  %s2 = inlined_call_operand.hbm [shape: f32[1,1], index: 2, kind: output, shape index: {}]
  %s3 = sld [smem:[#allocation0]]
  $region26: #{tpu_custom_call.1} parent=0
    _
  %s5 = ssub.s32 1, %s3
  %s6 = scalar_select 0, %s5, %s3
  $region1: #{tpu_custom_call.1} parent=0
    #allocation2 [shape = 'u8[512]{0}', space=vmem, size = 0x400, scoped, tag = 'input window, operand 0, single buffered']
    #allocation3 [shape = 's32[1]{0}', space=sflag, size = 0x4, scoped, tag = 'scoped memory for tpu_custom_call.1']
    #allocation4 [shape = 's32[1]{0}', space=sflag, size = 0x4, scoped, tag = 'scoped memory for tpu_custom_call.1']
    #allocation5 [shape = 'u8[4096]{0}', space=vmem, size = 0x1000, scoped, tag = 'input window, operand 1, single buffered']
    #allocation6 [shape = 's32[1]{0}', space=sflag, size = 0x4, scoped, tag = 'scoped memory for tpu_custom_call.1']
    #allocation7 [shape = 'u8[512]{0}', space=vmem, size = 0x400, scoped, tag = 'output window, operand 0, single buffered']
    %7 = vsyncpa [#allocation3], 0
    %8 = vsyncpa [#allocation6], 0
    %9 = vsyncpa [#allocation4], 0
    // Predicated region
    $region2: #{tpu_custom_call.1} parent=1 // pred_check
      _
    $region3: #{tpu_custom_call.1} parent=1 // pred_check_branch
      %11 = sbr.rel (0) target = $region5
    $region4: #{tpu_custom_call.1} parent=1 // pred_region
      %s13 = ssub.s32 16, 16
      %14 = vsyncadd [#allocation3], %s13
      %s16 = sshll.u32 [#allocation2], 4
      %s17 = int_to_ptr.vmem [resolvable:$true] %s16
      %19 = dma.hbm_to_vmem [thread:$0]  %s0, 16, %s17, [#allocation3]
    $region5: #{tpu_custom_call.1} parent=1 // pred_fallthru
      _
    // Predicated region
    $region6: #{tpu_custom_call.1} parent=1 // pred_check
      _
    $region7: #{tpu_custom_call.1} parent=1 // pred_check_branch
      %21 = sbr.rel (0) target = $region9
    $region8: #{tpu_custom_call.1} parent=1 // pred_region
      %s23 = ssub.s32 128, 128
      %24 = vsyncadd [#allocation6], %s23
      %s26 = sshll.u32 [#allocation5], 4
      %s27 = int_to_ptr.vmem [resolvable:$true] %s26
      %29 = dma.hbm_to_vmem [thread:$0]  %s1, 128, %s27, [#allocation6]
    $region9: #{tpu_custom_call.1} parent=1 // pred_fallthru
      _
    // Predicated region
    $region10: #{tpu_custom_call.1} parent=1 // pred_check
      _
    $region11: #{tpu_custom_call.1} parent=1 // pred_check_branch
      %31 = sbr.rel (0) target = $region13
    $region12: #{tpu_custom_call.1} parent=1 // pred_region
      %32 = dma.done [#allocation3], 16
    $region13: #{tpu_custom_call.1} parent=1 // pred_fallthru
      _
    // Predicated region
    $region14: #{tpu_custom_call.1} parent=1 // pred_check
      _
    $region15: #{tpu_custom_call.1} parent=1 // pred_check_branch
      %34 = sbr.rel (0) target = $region17
    $region16: #{tpu_custom_call.1} parent=1 // pred_region
      %35 = dma.done [#allocation6], 128
    $region17: #{tpu_custom_call.1} parent=1 // pred_fallthru
      _
    %v36 = vld [vmem:[#allocation2] sm:$0x1]
    %v37 = vld [vmem:[#allocation5] sm:$0x7f]
    %v39 = vrot.slane %v37, 4
    %vm41 = vcmask 31744
    %v43 = vsel %vm41, %v36, 0
    %vm45 = vcmask 1043456
    %v46 = vsel %vm45, %v37, 0
    %48 = vmatprep.subr.mxu0 0.0
    %49 = vmatpush1.msra.mxu0 0.0
    %50 = vmatprep.subr.mxu0 0.0
    %51 = vmatpush1.msra.mxu0 0.0
    %52 = vmatprep.subr.mxu0 0.0
    %53 = vmatpush1.msra.mxu0 0.0
    %54 = vmatprep.subr.mxu0 0.0
    %55 = vmatpush1.msra.mxu0 0.0
    %56 = vmatprep.subr.mxu0 0.0
    %57 = vmatpush1.msra.mxu0 0.0
    %58 = vmatprep.subr.mxu0 0.0
    %59 = vmatpush1.msra.mxu0 0.0
    %60 = vmatprep.subr.mxu0 0.0
    %61 = vmatpush1.msra.mxu0 0.0
    %62 = vmatprep.subr.mxu0 0.0
    %63 = vmatpush1.msra.mxu0 0.0
    %64 = vmatprep.subr.mxu0 0.0
    %65 = vmatpush1.msra.mxu0 0.0
    %66 = vmatprep.subr.mxu0 0.0
    %67 = vmatpush1.msra.mxu0 0.0
    %68 = vmatprep.subr.mxu0 0.0
    %69 = vmatpush1.msra.mxu0 0.0
    %70 = vmatprep.subr.mxu0 0.0
    %71 = vmatpush1.msra.mxu0 0.0
    %72 = vmatprep.subr.mxu0 0.0
    %73 = vmatpush1.msra.mxu0 0.0
    %74 = vmatprep.subr.mxu0 0.0
    %75 = vmatpush1.msra.mxu0 0.0
    %76 = vmatprep.subr.mxu0 0.0
    %77 = vmatpush1.msra.mxu0 0.0
    %78 = vmatprep.subr.mxu0 0.0
    %79 = vmatpush1.msra.mxu0 %v46
    %80 = vmatprep.subr.mxu0 0.0
    %81 = vmatpush2.msra.mxu0 0.0
    %82 = vmatprep.subr.mxu0 0.0
    %83 = vmatpush2.msra.mxu0 0.0
    %84 = vmatprep.subr.mxu0 0.0
    %85 = vmatpush2.msra.mxu0 0.0
    %86 = vmatprep.subr.mxu0 0.0
    %87 = vmatpush2.msra.mxu0 0.0
    %88 = vmatprep.subr.mxu0 0.0
    %89 = vmatpush2.msra.mxu0 0.0
    %90 = vmatprep.subr.mxu0 0.0
    %91 = vmatpush2.msra.mxu0 0.0
    %92 = vmatprep.subr.mxu0 0.0
    %93 = vmatpush2.msra.mxu0 0.0
    %94 = vmatprep.subr.mxu0 0.0
    %95 = vmatpush2.msra.mxu0 0.0
    %96 = vmatprep.subr.mxu0 0.0
    %97 = vmatpush2.msra.mxu0 0.0
    %98 = vmatprep.subr.mxu0 0.0
    %99 = vmatpush2.msra.mxu0 0.0
    %100 = vmatprep.subr.mxu0 0.0
    %101 = vmatpush2.msra.mxu0 0.0
    %102 = vmatprep.subr.mxu0 0.0
    %103 = vmatpush2.msra.mxu0 0.0
    %104 = vmatprep.subr.mxu0 0.0
    %105 = vmatpush2.msra.mxu0 0.0
    %106 = vmatprep.subr.mxu0 0.0
    %107 = vmatpush2.msra.mxu0 0.0
    %108 = vmatprep.subr.mxu0 0.0
    %109 = vmatpush2.msra.mxu0 0.0
    %110 = vmatprep.subr.mxu0 0.0
    %111 = vmatpush2.msra.mxu0 0.0
    %112 = vmatprep.mubr.f32.mxu0 0.0
    %113 = vmatmul.mubr.f32.gmra.mxu0 %v43
    %v114 = vpop.f32.mrf.mxu0
    %v115 = vadd.f32 %v39, %v114
    %v116 = vpop.f32.mrf.mxu0
    %117 = vdwg.mxu0
    %v118 = vmax.f32 %v115, 0.0
    %v119 = vrot.slane %v37, 5
    %v121 = vmul.f32 %v118, %v119
    %vm122 = vcmask 253952
    %v123 = vsel %vm122, %v121, 0.0
    %124 = vadd.xlane.f32.xlu0 %v123
    %v125 = vpop.xlane.xlu0 %124
    %v126 = vrot.slane %v37, 6
    %v128 = vadd.f32 %v125, %v126
    %vm129 = vcmask 0
    %130 = vst.msk [vmem:[#allocation7] sm:$0x1] %vm129, %v128
    // Predicated region
    $region18: #{tpu_custom_call.1} parent=1 // pred_check
      _
    $region19: #{tpu_custom_call.1} parent=1 // pred_check_branch
      %132 = sbr.rel (0) target = $region21
    $region20: #{tpu_custom_call.1} parent=1 // pred_region
      %s134 = ssub.s32 16, 16
      %135 = vsyncadd [#allocation4], %s134
      %s137 = sshll.u32 [#allocation7], 4
      %s138 = int_to_ptr.vmem [resolvable:$true] %s137
      %140 = dma.vmem_to_hbm [thread:$0]  %s138, 16, %s2, [#allocation4]
    $region21: #{tpu_custom_call.1} parent=1 // pred_fallthru
      _
    // Predicated region
    $region22: #{tpu_custom_call.1} parent=1 // pred_check
      _
    $region23: #{tpu_custom_call.1} parent=1 // pred_check_branch
      %142 = sbr.rel (0) target = $region25
    $region24: #{tpu_custom_call.1} parent=1 // pred_region
      %143 = dma.done [#allocation4], 16
    $region25: #{tpu_custom_call.1} parent=1 // pred_fallthru
      _
    %144 = vsyncpa [#allocation3], 1
    %145 = vsyncpa [#allocation6], 1
    %146 = vsyncpa [#allocation4], 1

</llo_original>
